<compile_context>
chip_gen: v7x
topology: tpu7x:2x2x1
jax: 0.10.0
libtpu: 0.0.40
codegen_flags: <defaults>
</compile_context>

<pallas_src>
import jax
import jax.numpy as jnp
from jax.experimental import pallas as pl
from jax.experimental.pallas import tpu as pltpu


def _round_up(x, m):
    return (x + m - 1) // m * m


def film_kernel(gb_ref, feat_ref, out_ref):
    # gb_ref   : (T_R, 2)     per-row [gamma, beta] (f32)
    # feat_ref : (T_R, T_HW)  features tile
    # out_ref  : (T_R, T_HW)
    gamma = gb_ref[:, 0:1]
    beta = gb_ref[:, 1:2]
    out_ref[...] = (
        feat_ref[...].astype(jnp.float32) * gamma + beta
    ).astype(out_ref.dtype)


def film_forward(features_nchw, condition, weight, bias):
    """FiLM forward.

    features_nchw: (B, C, H, W)
    condition:     (B, D)
    weight:        (2C, D)  (PyTorch nn.Linear convention)
    bias:          (2C,)
    returns        (B, C, H, W)
    """
    B, C, H, W = features_nchw.shape
    HW = H * W
    R = B * C
    itemsize = jnp.dtype(features_nchw.dtype).itemsize

    # --- tiny linear, done once in XLA (not per grid step) ------------------
    gamma_beta = (
        condition.astype(jnp.float32) @ weight.T.astype(jnp.float32)
        + bias.astype(jnp.float32)
    )                                                     # (B, 2C) f32
    gamma = gamma_beta[:, :C]                             # (B, C)
    beta = gamma_beta[:, C:]                              # (B, C)
    # Pack as one (B*C, 2) array: gb[r, 0] = gamma, gb[r, 1] = beta,
    # row order r = b*C + c matches the feature reshape below.
    gb = jnp.stack([gamma, beta], axis=-1).reshape(R, 2)  # (B*C, 2) f32

    # --- lane-dense 2-D layout: rows = (b, c), lanes = H*W -------------------
    feats = features_nchw.reshape(R, HW)

    # Tiling. Packed-sublane granularity for the row axis; ~8 MiB blocks.
    sub = max(8, 32 // itemsize)            # 8 f32, 16 bf16/f16, 32 int8/fp8
    BLOCK_BYTES = 8 * 1024 * 1024

    if HW * itemsize * sub <= BLOCK_BYTES:
        # Full-width row strips: T_HW == full array dim -> satisfies the lane
        # rule regardless of HW % 128, and no lane padding / masking waste.
        T_HW = HW
    else:
        # Enormous feature maps: tile the lane axis in multiples of 128;
        # the trailing partial block is masked by Pallas.
        T_HW = max(128, (BLOCK_BYTES // (sub * itemsize)) // 128 * 128)

    max_rows = max(sub, (BLOCK_BYTES // (T_HW * itemsize)) // sub * sub)
    T_R = min(_round_up(R, sub), max_rows)

    grid = (pl.cdiv(R, T_R), pl.cdiv(HW, T_HW))

    out = pl.pallas_call(
        film_kernel,
        out_shape=jax.ShapeDtypeStruct((R, HW), features_nchw.dtype),
        grid_spec=pltpu.PrefetchScalarGridSpec(
            num_scalar_prefetch=0,
            grid=grid,
            in_specs=[
                pl.BlockSpec((T_R, 2), lambda r, h: (r, 0)),      # gamma/beta
                pl.BlockSpec((T_R, T_HW), lambda r, h: (r, h)),   # features
            ],
            out_specs=pl.BlockSpec((T_R, T_HW), lambda r, h: (r, h)),
        ),
        compiler_params=pltpu.CompilerParams(
            dimension_semantics=("parallel", "parallel"),
            vmem_limit_bytes=48 * 1024 * 1024,
        ),
        cost_estimate=pl.CostEstimate(
            flops=2 * R * HW,
            bytes_accessed=2 * R * HW * itemsize + R * 2 * 4,
            transcendentals=0,
        ),
    )(gb, feats)

    return out.reshape(B, C, H, W)


def film_reference(features_nchw, condition, weight, bias):
    gamma_beta = condition @ weight.T + bias          # (B, 2C)
    C = features_nchw.shape[1]
    gamma = gamma_beta[:, :C][:, :, None, None]
    beta = gamma_beta[:, C:][:, :, None, None]
    return gamma * features_nchw + beta


if __name__ == "__main__":
    B, C, H, W = 2, 4, 16, 16
    D = 32  # conditioning_dim

    key = jax.random.PRNGKey(0)
    k1, k2, k3, k4 = jax.random.split(key, 4)

    features = jax.random.normal(k1, (B, C, H, W), dtype=jnp.float32)
    condition = jax.random.normal(k2, (B, D), dtype=jnp.float32)
    # Deterministic "Linear(conditioning_dim, 2*num_channels)" parameters.
    weight = jax.random.normal(k3, (2 * C, D), dtype=jnp.float32) * 0.1
    bias = jax.random.normal(k4, (2 * C,), dtype=jnp.float32) * 0.1

    out = film_forward(features, condition, weight, bias)
    out = jax.block_until_ready(out)

    ref = film_reference(features, condition, weight, bias)
    assert out.shape == (B, C, H, W)
    assert jnp.allclose(out, ref, atol=1e-5, rtol=1e-5), "mismatch vs reference"

    print("KERNEL_OK")
</pallas_src>

<mosaic_0001>
module attributes {stable_mosaic.version = 11 : i64} {
  func.func @film_kernel(%arg0: i32, %arg1: i32, %arg2: memref<8x2xf32, #tpu.memory_space<vmem>>, %arg3: memref<8x256xf32, #tpu.memory_space<vmem>>, %arg4: memref<8x256xf32, #tpu.memory_space<vmem>>) attributes {dimension_semantics = [#tpu.dimension_semantics<parallel>, #tpu.dimension_semantics<parallel>], iteration_bounds = array<i64: 1, 1>, scalar_prefetch = 0 : i64, scratch_operands = 0 : i64, tpu.core_type = #tpu.core_type<tc>, window_params = [{transform_indices = @transform_0, window_bounds = array<i64: 8, 2>}, {transform_indices = @transform_1, window_bounds = array<i64: 8, 256>}, {transform_indices = @transform_2, window_bounds = array<i64: 8, 256>}]} {
    %c0 = arith.constant 0 : index
    %c0_0 = arith.constant 0 : index
    %0 = vector.load %arg2[%c0, %c0_0] : memref<8x2xf32, #tpu.memory_space<vmem>>, vector<8x1xf32>
    %c0_1 = arith.constant 0 : index
    %c1 = arith.constant 1 : index
    %1 = vector.load %arg2[%c0_1, %c1] : memref<8x2xf32, #tpu.memory_space<vmem>>, vector<8x1xf32>
    %c0_2 = arith.constant 0 : index
    %c0_3 = arith.constant 0 : index
    %2 = vector.load %arg3[%c0_2, %c0_3] : memref<8x256xf32, #tpu.memory_space<vmem>>, vector<8x256xf32>
    %3 = vector.broadcast %0 : vector<8x1xf32> to vector<8x256xf32>
    %4 = arith.mulf %2, %3 : vector<8x256xf32>
    %5 = vector.broadcast %1 : vector<8x1xf32> to vector<8x256xf32>
    %6 = arith.addf %4, %5 : vector<8x256xf32>
    %c0_4 = arith.constant 0 : index
    %c0_5 = arith.constant 0 : index
    %7 = vector.load %arg4[%c0_4, %c0_5] : memref<8x256xf32, #tpu.memory_space<vmem>>, vector<8x256xf32>
    tpu.vector_store %arg4[%c0_4, %c0_5], %6 {strides = array<i32>} : memref<8x256xf32, #tpu.memory_space<vmem>>, vector<8x256xf32>,
    return
  }
  func.func @transform_0(%arg0: i32, %arg1: i32) -> (i32, i32) {
    %c0_i32 = arith.constant 0 : i32
    %c0_i32_0 = arith.constant 0 : i32
    return %arg0, %c0_i32 : i32, i32
  }
  func.func @transform_1(%arg0: i32, %arg1: i32) -> (i32, i32) {
    %c0_i32 = arith.constant 0 : i32
    return %arg0, %arg1 : i32, i32
  }
  func.func @transform_2(%arg0: i32, %arg1: i32) -> (i32, i32) {
    %c0_i32 = arith.constant 0 : i32
    return %arg0, %arg1 : i32, i32
  }
}

</mosaic_0001>

<llo_original>
// kernel: tpu_custom_call.1
$region0: #{tpu_custom_call.1}
  #allocation0 [shape = 'u32[]', space=smem, size = 0x4, offset = 0x4, fixed_abs, tag = 'smem constant byte address 0x4 - core index']
  #allocation1 [shape = 'u32[144,128]{1,0:T(1,128)}', space=vmem, size = 0x12000, scoped, tag = 'internal scratch']
  %s0 = inlined_call_operand.vmem [shape: f32[8,2], index: 0, kind: input, shape index: {}]
  %s1 = inlined_call_operand.hbm [shape: f32[8,256], index: 1, kind: input, shape index: {}]
  %s2 = inlined_call_operand.hbm [shape: f32[8,256], index: 2, kind: output, shape index: {}]
  %s3 = sld [smem:[#allocation0]]
  $region22: #{tpu_custom_call.1} parent=0
    _
  %s5 = ssub.s32 1, %s3
  %s6 = scalar_select 0, %s5, %s3
  $region1: #{tpu_custom_call.1} parent=0
    #allocation2 [shape = 'u8[8192]{0}', space=vmem, size = 0x2000, scoped, tag = 'input window, operand 1, single buffered']
    #allocation3 [shape = 's32[1]{0}', space=sflag, size = 0x4, scoped, tag = 'scoped memory for tpu_custom_call.1']
    #allocation4 [shape = 's32[1]{0}', space=sflag, size = 0x4, scoped, tag = 'scoped memory for tpu_custom_call.1']
    #allocation5 [shape = 'u8[8192]{0}', space=vmem, size = 0x2000, scoped, tag = 'output window, operand 0, single buffered']
    %7 = vsyncpa [#allocation3], 0
    %8 = vsyncpa [#allocation4], 0
    // Predicated region
    $region2: #{tpu_custom_call.1} parent=1 // pred_check
      _
    $region3: #{tpu_custom_call.1} parent=1 // pred_check_branch
      %10 = sbr.rel (0) target = $region5
    $region4: #{tpu_custom_call.1} parent=1 // pred_region
      _
    $region5: #{tpu_custom_call.1} parent=1 // pred_fallthru
      _
    // Predicated region
    $region6: #{tpu_custom_call.1} parent=1 // pred_check
      _
    $region7: #{tpu_custom_call.1} parent=1 // pred_check_branch
      %12 = sbr.rel (0) target = $region9
    $region8: #{tpu_custom_call.1} parent=1 // pred_region
      %s14 = ssub.s32 256, 256
      %15 = vsyncadd [#allocation3], %s14
      %s17 = sshll.u32 [#allocation2], 4
      %s18 = int_to_ptr.vmem [resolvable:$true] %s17
      %20 = dma.hbm_to_vmem [thread:$0]  %s1, 256, %s18, [#allocation3]
    $region9: #{tpu_custom_call.1} parent=1 // pred_fallthru
      _
    // Predicated region
    $region10: #{tpu_custom_call.1} parent=1 // pred_check
      _
    $region11: #{tpu_custom_call.1} parent=1 // pred_check_branch
      %22 = sbr.rel (0) target = $region13
    $region12: #{tpu_custom_call.1} parent=1 // pred_region
      %23 = dma.done [#allocation3], 256
    $region13: #{tpu_custom_call.1} parent=1 // pred_fallthru
      _
    %v24 = vld [vmem:[%s0] sm:$0xff]
    %v25 = vld [vmem:[#allocation2] sm:$0xff]
    %v26 = vld [vmem:[#allocation2 + $0x8] sm:$0xff]
    %28 = vset.pattern.permute.xlu0 0
    %29 = vperm.xlu0 %28, %v24
    %v30 = vpop.permute.xlu0 %29
    %v32 = vmul.f32 %v25, %v30
    %v33 = vmul.f32 %v26, %v30
    %34 = vset.pattern.permute.xlu0 1
    %35 = vperm.xlu0 %34, %v24
    %v36 = vpop.permute.xlu0 %35
    %v38 = vadd.f32 %v32, %v36
    %v39 = vadd.f32 %v33, %v36
    %40 = vst [vmem:[#allocation5] sm:$0xff] %v38
    %41 = vst [vmem:[#allocation5 + $0x8] sm:$0xff] %v39
    // Predicated region
    $region14: #{tpu_custom_call.1} parent=1 // pred_check
      _
    $region15: #{tpu_custom_call.1} parent=1 // pred_check_branch
      %43 = sbr.rel (0) target = $region17
    $region16: #{tpu_custom_call.1} parent=1 // pred_region
      %s45 = ssub.s32 256, 256
      %46 = vsyncadd [#allocation4], %s45
      %s48 = sshll.u32 [#allocation5], 4
      %s49 = int_to_ptr.vmem [resolvable:$true] %s48
      %51 = dma.vmem_to_hbm [thread:$0]  %s49, 256, %s2, [#allocation4]
    $region17: #{tpu_custom_call.1} parent=1 // pred_fallthru
      _
    // Predicated region
    $region18: #{tpu_custom_call.1} parent=1 // pred_check
      _
    $region19: #{tpu_custom_call.1} parent=1 // pred_check_branch
      %53 = sbr.rel (0) target = $region21
    $region20: #{tpu_custom_call.1} parent=1 // pred_region
      %54 = dma.done [#allocation4], 256
    $region21: #{tpu_custom_call.1} parent=1 // pred_fallthru
      _
    %55 = vsyncpa [#allocation3], 1
    %56 = vsyncpa [#allocation4], 1

</llo_original>
